<compile_context>
chip_gen: v6e
topology: v6e:2x2x1
jax: 0.10.0
libtpu: 0.0.40
codegen_flags: <defaults>
</compile_context>

<pallas_src>
import functools

import jax
import jax.numpy as jnp
from jax.experimental import pallas as pl
from jax.experimental.pallas import tpu as pltpu

LANE = 128  # TPU lane width; hidden/output feature dims are padded to this.


def _pick_tile(n_pad, target=512):
    """Largest multiple of 128 that divides n_pad and is <= target."""
    best = LANE
    t = LANE
    while t <= min(target, n_pad):
        if n_pad % t == 0:
            best = t
        t += LANE
    return best


def _agg_kernel(adj_ref, sup_ref, b_ref, o_ref, *, tk, apply_relu):
    """One GraphConvolution aggregation: out = [relu](adj @ support + bias).

    Grid: (row_tile i, reduction tile k).  The output block (TM, 128) is the
    f32 accumulator (its index map only depends on i, so it stays resident in
    VMEM across the k sweep).  support is fully resident; adj is streamed.
    """
    k = pl.program_id(1)
    nk = pl.num_programs(1)

    # Fold the bias into the accumulator init.
    @pl.when(k == 0)
    def _():
        o_ref[...] = jnp.broadcast_to(b_ref[...], o_ref.shape)

    # Reduction step: adj tile (TM, TK) bf16 @ support slice (TK, 128) bf16,
    # f32 accumulation on the MXU.
    start = pl.multiple_of(k * tk, LANE)
    sup = sup_ref[pl.ds(start, tk), :]
    o_ref[...] += jnp.dot(adj_ref[...], sup, preferred_element_type=jnp.float32)

    if apply_relu:
        @pl.when(k == nk - 1)
        def _():
            o_ref[...] = jnp.maximum(o_ref[...], 0.0)


def _gcn_aggregate(adj_p, support_p, bias_p, *, apply_relu, tm, tk):
    """pallas_call wrapper for one layer's adj @ support + bias aggregation."""
    n_pad = adj_p.shape[0]
    nt_i = n_pad // tm
    nt_k = n_pad // tk

    # VMEM budget: adj double-buffered + resident support (2x safety for
    # buffering) + f32 output block double-buffered + bias + headroom.
    needed = (2 * tm * tk * 2
              + 2 * n_pad * LANE * 2
              + 2 * tm * LANE * 4
              + 2 * 8 * LANE * 4
              + (1 << 20))
    vmem_limit = int(min(max(2 * needed, 32 << 20), 64 << 20))

    kernel = functools.partial(_agg_kernel, tk=tk, apply_relu=apply_relu)
    return pl.pallas_call(
        kernel,
        out_shape=jax.ShapeDtypeStruct((n_pad, LANE), jnp.float32),
        grid=(nt_i, nt_k),
        in_specs=[
            pl.BlockSpec((tm, tk), lambda i, k: (i, k)),        # adj: streamed
            pl.BlockSpec((n_pad, LANE), lambda i, k: (0, 0)),   # support: resident
            pl.BlockSpec((1, LANE), lambda i, k: (0, 0)),       # bias: resident
        ],
        out_specs=pl.BlockSpec((tm, LANE), lambda i, k: (i, 0)),
        compiler_params=pltpu.CompilerParams(
            # Row tiles are independent -> "parallel" (v7x megacore can split
            # them); the reduction axis is a carried accumulation -> "arbitrary".
            dimension_semantics=("parallel", "arbitrary"),
            vmem_limit_bytes=vmem_limit),
    )(adj_p, support_p, bias_p)


def preprocess_adj(adj):
    """Pad the (normalized, dense) adjacency to a 128-multiple and cast to bf16.

    Constant per graph -- do this ONCE and reuse the result across forward
    calls (the pad+cast reads/writes more bytes than a whole kernel pass).
    """
    n = adj.shape[0]
    n_pad = ((n + LANE - 1) // LANE) * LANE
    adj_p = jnp.zeros((n_pad, n_pad), jnp.bfloat16)
    adj_p = adj_p.at[:n, :n].set(adj.astype(jnp.bfloat16))
    return adj_p


def gcn_forward(x, adj_p, params, *, max_tile=512):
    """GCN.forward (eval mode): gc2(dropout(relu(gc1(x, adj))), adj).

    `adj_p` is the pre-padded bf16 adjacency from preprocess_adj().
    Zero padding keeps the math exact: padded adj columns are zero so padded
    (dummy) nodes never contribute to real rows; padded feature lanes carry
    zero weights/biases so they stay zero.
    """
    n, nfeat = x.shape
    n_pad = adj_p.shape[0]
    nhid = params["w1"].shape[1]
    nout = params["w2"].shape[1]
    assert params["w2"].shape[0] == nhid
    assert nhid <= LANE and nout <= LANE

    tm = _pick_tile(n_pad, max_tile)   # row tile
    tk = _pick_tile(n_pad, max_tile)   # reduction tile

    # ---- layer 1: support1 = x @ W1 (tiny -> plain XLA), then aggregate ----
    s1 = jnp.dot(x.astype(jnp.float32), params["w1"].astype(jnp.float32),
                 preferred_element_type=jnp.float32)
    s1_p = jnp.zeros((n_pad, LANE), jnp.bfloat16).at[:n, :nhid].set(
        s1.astype(jnp.bfloat16))
    b1_p = jnp.zeros((1, LANE), jnp.float32).at[0, :nhid].set(
        params["b1"].astype(jnp.float32))
    h_p = _gcn_aggregate(adj_p, s1_p, b1_p, apply_relu=True, tm=tm, tk=tk)

    # Dropout is identity in eval mode.

    # ---- layer 2: support2 = h @ W2 (tiny -> plain XLA), then aggregate ----
    w2_p = jnp.zeros((LANE, LANE), jnp.float32).at[:nhid, :nout].set(
        params["w2"].astype(jnp.float32))
    s2_p = jnp.dot(h_p, w2_p, preferred_element_type=jnp.float32).astype(
        jnp.bfloat16)
    b2_p = jnp.zeros((1, LANE), jnp.float32).at[0, :nout].set(
        params["b2"].astype(jnp.float32))
    out_p = _gcn_aggregate(adj_p, s2_p, b2_p, apply_relu=False, tm=tm, tk=tk)

    return out_p[:n, :nout]


def init_params(key, nfeat, nhid, nout):
    # pygcn GraphConvolution init: uniform(-stdv, stdv), stdv = 1/sqrt(out_features)
    k1, k2, k3, k4 = jax.random.split(key, 4)
    s1 = 1.0 / jnp.sqrt(jnp.float32(nhid))
    s2 = 1.0 / jnp.sqrt(jnp.float32(nout))
    return {
        "w1": jax.random.uniform(k1, (nfeat, nhid), jnp.float32, -s1, s1),
        "b1": jax.random.uniform(k2, (nhid,), jnp.float32, -s1, s1),
        "w2": jax.random.uniform(k3, (nhid, nout), jnp.float32, -s2, s2),
        "b2": jax.random.uniform(k4, (nout,), jnp.float32, -s2, s2),
    }


if __name__ == "__main__":
    key = jax.random.PRNGKey(0)
    kx, kadj, kp = jax.random.split(key, 3)

    # Small graph: 256 nodes, 32 input features, 16 hidden, 8 output classes.
    N, NFEAT, NHID, NOUT = 256, 32, 16, 8
    dropout = 0.5  # unused in eval mode

    x = jax.random.normal(kx, (N, NFEAT), jnp.float32)

    # Symmetric-normalized dense adjacency with self loops (standard GCN preprocessing)
    a = (jax.random.uniform(kadj, (N, N)) < 0.1).astype(jnp.float32)
    a = jnp.maximum(a, a.T) + jnp.eye(N, dtype=jnp.float32)
    deg = jnp.sum(a, axis=1)
    d_inv_sqrt = 1.0 / jnp.sqrt(deg)
    adj = a * d_inv_sqrt[:, None] * d_inv_sqrt[None, :]

    params = init_params(kp, NFEAT, NHID, NOUT)

    # Padded bf16 adjacency is a per-graph constant: built once, reused.
    adj_p = preprocess_adj(adj)

    fwd = jax.jit(gcn_forward)
    out = fwd(x, adj_p, params)
    out = jax.block_until_ready(out)

    # Reference check against plain JAX (f32); kernel uses bf16 adj/support on
    # the MXU with f32 accumulation, so allow a modest tolerance.
    ref_h = jnp.maximum(adj @ (x @ params["w1"]) + params["b1"], 0.0)
    ref = adj @ (ref_h @ params["w2"]) + params["b2"]
    assert out.shape == (N, NOUT)
    max_err = float(jnp.max(jnp.abs(out - ref)))
    assert jnp.allclose(out, ref, atol=2e-2, rtol=2e-2), f"max_err={max_err}"

    print("KERNEL_OK")
</pallas_src>

<mosaic_0001>
module attributes {stable_mosaic.version = 11 : i64} {
  func.func @_agg_kernel(%arg0: i32, %arg1: i32, %arg2: memref<256x256xbf16, #tpu.memory_space<vmem>>, %arg3: memref<256x128xbf16, #tpu.memory_space<vmem>>, %arg4: memref<1x128xf32, #tpu.memory_space<vmem>>, %arg5: memref<256x128xf32, #tpu.memory_space<vmem>>) attributes {dimension_semantics = [#tpu.dimension_semantics<parallel>, #tpu.dimension_semantics<arbitrary>], iteration_bounds = array<i64: 1, 1>, scalar_prefetch = 0 : i64, scratch_operands = 0 : i64, tpu.core_type = #tpu.core_type<tc>, window_params = [{transform_indices = @transform_0, window_bounds = array<i64: 256, 256>}, {pipeline_mode = #tpu.pipeline_mode<synchronous>, transform_indices = @transform_1, window_bounds = array<i64: 256, 128>}, {pipeline_mode = #tpu.pipeline_mode<synchronous>, transform_indices = @transform_2, window_bounds = array<i64: 1, 128>}, {transform_indices = @transform_3, window_bounds = array<i64: 256, 128>}]} {
    %c0_i32 = arith.constant 0 : i32
    %0 = arith.cmpi eq, %arg1, %c0_i32 : i32
    %1 = arith.extui %0 : i1 to i32
    %c0_i32_0 = arith.constant 0 : i32
    %2 = arith.cmpi ne, %1, %c0_i32_0 : i32
    scf.if %2 {
      %c0_9 = arith.constant 0 : index
      %c0_10 = arith.constant 0 : index
      %15 = vector.load %arg4[%c0_9, %c0_10] : memref<1x128xf32, #tpu.memory_space<vmem>>, vector<1x128xf32>
      %16 = vector.shape_cast %15 : vector<1x128xf32> to vector<1x128xf32>
      %17 = vector.broadcast %16 : vector<1x128xf32> to vector<256x128xf32>
      %c0_11 = arith.constant 0 : index
      %c0_12 = arith.constant 0 : index
      %18 = vector.load %arg5[%c0_11, %c0_12] : memref<256x128xf32, #tpu.memory_space<vmem>>, vector<256x128xf32>
      tpu.vector_store %arg5[%c0_11, %c0_12], %17 {strides = array<i32>} : memref<256x128xf32, #tpu.memory_space<vmem>>, vector<256x128xf32>,
    } else {
    }
    %c256_i32 = arith.constant 256 : i32
    %3 = arith.muli %arg1, %c256_i32 : i32
    %4 = tpu.assume_multiple %3, 128 : i32
    %5 = arith.index_cast %4 : i32 to index
    %c0 = arith.constant 0 : index
    %6 = vector.load %arg3[%5, %c0] : memref<256x128xbf16, #tpu.memory_space<vmem>>, vector<256x128xbf16>
    %c0_1 = arith.constant 0 : index
    %c0_2 = arith.constant 0 : index
    %7 = vector.load %arg5[%c0_1, %c0_2] : memref<256x128xf32, #tpu.memory_space<vmem>>, vector<256x128xf32>
    %c0_3 = arith.constant 0 : index
    %c0_4 = arith.constant 0 : index
    %8 = vector.load %arg2[%c0_3, %c0_4] : memref<256x256xbf16, #tpu.memory_space<vmem>>, vector<256x256xbf16>
    %cst = arith.constant dense<0.000000e+00> : vector<256x128xf32>
    %9 = tpu.matmul %8, %6, %cst {dimension_numbers = #tpu.dot_dimension_numbers<[1], [0], [0], [1], [0, 0, 1, 1], [], []>} : vector<256x256xbf16>, vector<256x128xbf16>, vector<256x128xf32> -> vector<256x128xf32>
    %10 = arith.addf %7, %9 : vector<256x128xf32>
    %c0_5 = arith.constant 0 : index
    %c0_6 = arith.constant 0 : index
    %11 = vector.load %arg5[%c0_5, %c0_6] : memref<256x128xf32, #tpu.memory_space<vmem>>, vector<256x128xf32>
    tpu.vector_store %arg5[%c0_5, %c0_6], %10 {strides = array<i32>} : memref<256x128xf32, #tpu.memory_space<vmem>>, vector<256x128xf32>,
    %c0_i32_7 = arith.constant 0 : i32
    %12 = arith.cmpi eq, %arg1, %c0_i32_7 : i32
    %13 = arith.extui %12 : i1 to i32
    %c0_i32_8 = arith.constant 0 : i32
    %14 = arith.cmpi ne, %13, %c0_i32_8 : i32
    scf.if %14 {
      %c0_9 = arith.constant 0 : index
      %c0_10 = arith.constant 0 : index
      %15 = vector.load %arg5[%c0_9, %c0_10] : memref<256x128xf32, #tpu.memory_space<vmem>>, vector<256x128xf32>
      %cst_11 = arith.constant 0.000000e+00 : f32
      %16 = vector.broadcast %cst_11 : f32 to vector<256x128xf32>
      %17 = arith.maximumf %15, %16 : vector<256x128xf32>
      %c0_12 = arith.constant 0 : index
      %c0_13 = arith.constant 0 : index
      %18 = vector.load %arg5[%c0_12, %c0_13] : memref<256x128xf32, #tpu.memory_space<vmem>>, vector<256x128xf32>
      tpu.vector_store %arg5[%c0_12, %c0_13], %17 {strides = array<i32>} : memref<256x128xf32, #tpu.memory_space<vmem>>, vector<256x128xf32>,
    } else {
    }
    return
  }
  func.func @transform_0(%arg0: i32, %arg1: i32) -> (i32, i32) {
    %c0_i32 = arith.constant 0 : i32
    return %arg0, %arg1 : i32, i32
  }
  func.func @transform_1(%arg0: i32, %arg1: i32) -> (i32, i32) {
    %c0_i32 = arith.constant 0 : i32
    %c0_i32_0 = arith.constant 0 : i32
    %c0_i32_1 = arith.constant 0 : i32
    return %c0_i32, %c0_i32_0 : i32, i32
  }
  func.func @transform_2(%arg0: i32, %arg1: i32) -> (i32, i32) {
    %c0_i32 = arith.constant 0 : i32
    %c0_i32_0 = arith.constant 0 : i32
    %c0_i32_1 = arith.constant 0 : i32
    return %c0_i32, %c0_i32_0 : i32, i32
  }
  func.func @transform_3(%arg0: i32, %arg1: i32) -> (i32, i32) {
    %c0_i32 = arith.constant 0 : i32
    %c0_i32_0 = arith.constant 0 : i32
    return %arg0, %c0_i32 : i32, i32
  }
}

module attributes {stable_mosaic.version = 11 : i64} {
  func.func @_agg_kernel(%arg0: i32, %arg1: i32, %arg2: memref<256x256xbf16, #tpu.memory_space<vmem>>, %arg3: memref<256x128xbf16, #tpu.memory_space<vmem>>, %arg4: memref<1x128xf32, #tpu.memory_space<vmem>>, %arg5: memref<256x128xf32, #tpu.memory_space<vmem>>) attributes {dimension_semantics = [#tpu.dimension_semantics<parallel>, #tpu.dimension_semantics<arbitrary>], iteration_bounds = array<i64: 1, 1>, scalar_prefetch = 0 : i64, scratch_operands = 0 : i64, tpu.core_type = #tpu.core_type<tc>, window_params = [{transform_indices = @transform_0, window_bounds = array<i64: 256, 256>}, {pipeline_mode = #tpu.pipeline_mode<synchronous>, transform_indices = @transform_1, window_bounds = array<i64: 256, 128>}, {pipeline_mode = #tpu.pipeline_mode<synchronous>, transform_indices = @transform_2, window_bounds = array<i64: 1, 128>}, {transform_indices = @transform_3, window_bounds = array<i64: 256, 128>}]} {
    %c0_i32 = arith.constant 0 : i32
    %0 = arith.cmpi eq, %arg1, %c0_i32 : i32
    %1 = arith.extui %0 : i1 to i32
    %c0_i32_0 = arith.constant 0 : i32
    %2 = arith.cmpi ne, %1, %c0_i32_0 : i32
    scf.if %2 {
      %c0_7 = arith.constant 0 : index
      %c0_8 = arith.constant 0 : index
      %12 = vector.load %arg4[%c0_7, %c0_8] : memref<1x128xf32, #tpu.memory_space<vmem>>, vector<1x128xf32>
      %13 = vector.shape_cast %12 : vector<1x128xf32> to vector<1x128xf32>
      %14 = vector.broadcast %13 : vector<1x128xf32> to vector<256x128xf32>
      %c0_9 = arith.constant 0 : index
      %c0_10 = arith.constant 0 : index
      %15 = vector.load %arg5[%c0_9, %c0_10] : memref<256x128xf32, #tpu.memory_space<vmem>>, vector<256x128xf32>
      tpu.vector_store %arg5[%c0_9, %c0_10], %14 {strides = array<i32>} : memref<256x128xf32, #tpu.memory_space<vmem>>, vector<256x128xf32>,
    } else {
    }
    %c256_i32 = arith.constant 256 : i32
    %3 = arith.muli %arg1, %c256_i32 : i32
    %4 = tpu.assume_multiple %3, 128 : i32
    %5 = arith.index_cast %4 : i32 to index
    %c0 = arith.constant 0 : index
    %6 = vector.load %arg3[%5, %c0] : memref<256x128xbf16, #tpu.memory_space<vmem>>, vector<256x128xbf16>
    %c0_1 = arith.constant 0 : index
    %c0_2 = arith.constant 0 : index
    %7 = vector.load %arg5[%c0_1, %c0_2] : memref<256x128xf32, #tpu.memory_space<vmem>>, vector<256x128xf32>
    %c0_3 = arith.constant 0 : index
    %c0_4 = arith.constant 0 : index
    %8 = vector.load %arg2[%c0_3, %c0_4] : memref<256x256xbf16, #tpu.memory_space<vmem>>, vector<256x256xbf16>
    %cst = arith.constant dense<0.000000e+00> : vector<256x128xf32>
    %9 = tpu.matmul %8, %6, %cst {dimension_numbers = #tpu.dot_dimension_numbers<[1], [0], [0], [1], [0, 0, 1, 1], [], []>} : vector<256x256xbf16>, vector<256x128xbf16>, vector<256x128xf32> -> vector<256x128xf32>
    %10 = arith.addf %7, %9 : vector<256x128xf32>
    %c0_5 = arith.constant 0 : index
    %c0_6 = arith.constant 0 : index
    %11 = vector.load %arg5[%c0_5, %c0_6] : memref<256x128xf32, #tpu.memory_space<vmem>>, vector<256x128xf32>
    tpu.vector_store %arg5[%c0_5, %c0_6], %10 {strides = array<i32>} : memref<256x128xf32, #tpu.memory_space<vmem>>, vector<256x128xf32>,
    return
  }
  func.func @transform_0(%arg0: i32, %arg1: i32) -> (i32, i32) {
    %c0_i32 = arith.constant 0 : i32
    return %arg0, %arg1 : i32, i32
  }
  func.func @transform_1(%arg0: i32, %arg1: i32) -> (i32, i32) {
    %c0_i32 = arith.constant 0 : i32
    %c0_i32_0 = arith.constant 0 : i32
    %c0_i32_1 = arith.constant 0 : i32
    return %c0_i32, %c0_i32_0 : i32, i32
  }
  func.func @transform_2(%arg0: i32, %arg1: i32) -> (i32, i32) {
    %c0_i32 = arith.constant 0 : i32
    %c0_i32_0 = arith.constant 0 : i32
    %c0_i32_1 = arith.constant 0 : i32
    return %c0_i32, %c0_i32_0 : i32, i32
  }
  func.func @transform_3(%arg0: i32, %arg1: i32) -> (i32, i32) {
    %c0_i32 = arith.constant 0 : i32
    %c0_i32_0 = arith.constant 0 : i32
    return %arg0, %c0_i32 : i32, i32
  }
}

</mosaic_0001>

<llo_original>
// kernel: gcn_forward.3
$region0: #{gcn_forward.3}
  #allocation0 [shape = 'u32[]', space=smem, size = 0x4, offset = 0x4, fixed_abs, tag = 'smem constant byte address 0x4 - core index']
  #allocation1 [shape = 'u32[144,128]{1,0:T(1,128)}', space=vmem, size = 0x12000, scoped, tag = 'internal scratch']
  %s0 = inlined_call_operand.vmem [shape: bf16[256,256], index: 0, kind: input, shape index: {}]
  %s1 = inlined_call_operand.vmem [shape: bf16[256,128], index: 1, kind: input, shape index: {}]
  %s2 = inlined_call_operand.vmem [shape: f32[1,128], index: 2, kind: input, shape index: {}]
  %s3 = inlined_call_operand.vmem [shape: f32[256,128], index: 3, kind: output, shape index: {}]
  %s4 = sld [smem:[#allocation0]]
  $region26: #{gcn_forward.3} parent=0
    _
  %s6 = ssub.s32 1, %s4
  %s7 = scalar_select 0, %s6, %s4
  // Predicated region
  $region2: #{gcn_forward.3} parent=0 // pred_check
    _
  $region3: #{gcn_forward.3} parent=0 // pred_check_branch
    %9 = sbr.rel (0) target = $region5
  $region4: #{gcn_forward.3} parent=0 // pred_region
    _
  $region5: #{gcn_forward.3} parent=0 // pred_fallthru
    _
  // Predicated region
  $region6: #{gcn_forward.3} parent=0 // pred_check
    _
  $region7: #{gcn_forward.3} parent=0 // pred_check_branch
    %11 = sbr.rel (0) target = $region9
  $region8: #{gcn_forward.3} parent=0 // pred_region
    _
  $region9: #{gcn_forward.3} parent=0 // pred_fallthru
    _
  // Predicated region
  $region10: #{gcn_forward.3} parent=0 // pred_check
    _
  $region11: #{gcn_forward.3} parent=0 // pred_check_branch
    %13 = sbr.rel (0) target = $region13
  $region12: #{gcn_forward.3} parent=0 // pred_region
    _
  $region13: #{gcn_forward.3} parent=0 // pred_fallthru
    _
  %p15 = scmp.eq.s32.totalorder 0, 0
  // Predicated region
  $region14: #{gcn_forward.3} parent=0 // pred_check
    %p16 = pneg %p15
  $region15: #{gcn_forward.3} parent=0 // pred_check_branch
    %18 = sbr.rel (%p16) target = $region17
  $region16: #{gcn_forward.3} parent=0 // pred_region
    %v19 = vld [vmem:[%s2] sm:$0x1]
    %v21 = vlaneseq
    %v22 = vshrl.u32 %v21, 7
    %v23 = vsub.s32 0, %v22
    %v24 = vrot.slane %v19, %v23
    %26 = vst [vmem:[%s3] sm:$0xff] %v24
    %27 = vst [vmem:[%s3 + $0x8] sm:$0xff] %v24
    %28 = vst [vmem:[%s3 + $0x10] sm:$0xff] %v24
    %29 = vst [vmem:[%s3 + $0x18] sm:$0xff] %v24
    %30 = vst [vmem:[%s3 + $0x20] sm:$0xff] %v24
    %31 = vst [vmem:[%s3 + $0x28] sm:$0xff] %v24
    %32 = vst [vmem:[%s3 + $0x30] sm:$0xff] %v24
    %33 = vst [vmem:[%s3 + $0x38] sm:$0xff] %v24
    %34 = vst [vmem:[%s3 + $0x40] sm:$0xff] %v24
    %35 = vst [vmem:[%s3 + $0x48] sm:$0xff] %v24
    %36 = vst [vmem:[%s3 + $0x50] sm:$0xff] %v24
    %37 = vst [vmem:[%s3 + $0x58] sm:$0xff] %v24
    %38 = vst [vmem:[%s3 + $0x60] sm:$0xff] %v24
    %39 = vst [vmem:[%s3 + $0x68] sm:$0xff] %v24
    %40 = vst [vmem:[%s3 + $0x70] sm:$0xff] %v24
    %41 = vst [vmem:[%s3 + $0x78] sm:$0xff] %v24
    %42 = vst [vmem:[%s3 + $0x80] sm:$0xff] %v24
    %43 = vst [vmem:[%s3 + $0x88] sm:$0xff] %v24
    %44 = vst [vmem:[%s3 + $0x90] sm:$0xff] %v24
    %45 = vst [vmem:[%s3 + $0x98] sm:$0xff] %v24
    %46 = vst [vmem:[%s3 + $0xa0] sm:$0xff] %v24
    %47 = vst [vmem:[%s3 + $0xa8] sm:$0xff] %v24
    %48 = vst [vmem:[%s3 + $0xb0] sm:$0xff] %v24
    %49 = vst [vmem:[%s3 + $0xb8] sm:$0xff] %v24
    %50 = vst [vmem:[%s3 + $0xc0] sm:$0xff] %v24
    %51 = vst [vmem:[%s3 + $0xc8] sm:$0xff] %v24
    %52 = vst [vmem:[%s3 + $0xd0] sm:$0xff] %v24
    %53 = vst [vmem:[%s3 + $0xd8] sm:$0xff] %v24
    %54 = vst [vmem:[%s3 + $0xe0] sm:$0xff] %v24
    %55 = vst [vmem:[%s3 + $0xe8] sm:$0xff] %v24
    %56 = vst [vmem:[%s3 + $0xf0] sm:$0xff] %v24
    %57 = vst [vmem:[%s3 + $0xf8] sm:$0xff] %v24
  $region17: #{gcn_forward.3} parent=0 // pred_fallthru
    _
  %s58 = smul.u32 0, 256
  %s59 = sshra.s32 %s58, 3
  %s60 = sand.u32 %s58, 7
  %s61 = smul.addr %s59, 4
  %s62 = scalar_lea.vmem %s1, %s61
  %v63 = vld [vmem:[%s62] sm:$0xf]
  %v64 = vld [vmem:[%s62 + $0x4] sm:$0xf]
  %v65 = vld [vmem:[%s62 + $0x8] sm:$0xf]
  %v66 = vld [vmem:[%s62 + $0xc] sm:$0xf]
  %v67 = vld [vmem:[%s62 + $0x10] sm:$0xf]
  %v68 = vld [vmem:[%s62 + $0x14] sm:$0xf]
  %v69 = vld [vmem:[%s62 + $0x18] sm:$0xf]
  %v70 = vld [vmem:[%s62 + $0x1c] sm:$0xf]
  %v71 = vld [vmem:[%s62 + $0x20] sm:$0xf]
  %v72 = vld [vmem:[%s62 + $0x24] sm:$0xf]
  %v73 = vld [vmem:[%s62 + $0x28] sm:$0xf]
  %v74 = vld [vmem:[%s62 + $0x2c] sm:$0xf]
  %v75 = vld [vmem:[%s62 + $0x30] sm:$0xf]
  %v76 = vld [vmem:[%s62 + $0x34] sm:$0xf]
  %v77 = vld [vmem:[%s62 + $0x38] sm:$0xf]
  %v78 = vld [vmem:[%s62 + $0x3c] sm:$0xf]
  %v79 = vld [vmem:[%s62 + $0x40] sm:$0xf]
  %v80 = vld [vmem:[%s62 + $0x44] sm:$0xf]
  %v81 = vld [vmem:[%s62 + $0x48] sm:$0xf]
  %v82 = vld [vmem:[%s62 + $0x4c] sm:$0xf]
  %v83 = vld [vmem:[%s62 + $0x50] sm:$0xf]
  %v84 = vld [vmem:[%s62 + $0x54] sm:$0xf]
  %v85 = vld [vmem:[%s62 + $0x58] sm:$0xf]
  %v86 = vld [vmem:[%s62 + $0x5c] sm:$0xf]
  %v87 = vld [vmem:[%s62 + $0x60] sm:$0xf]
  %v88 = vld [vmem:[%s62 + $0x64] sm:$0xf]
  %v89 = vld [vmem:[%s62 + $0x68] sm:$0xf]
  %v90 = vld [vmem:[%s62 + $0x6c] sm:$0xf]
  %v91 = vld [vmem:[%s62 + $0x70] sm:$0xf]
  %v92 = vld [vmem:[%s62 + $0x74] sm:$0xf]
  %v93 = vld [vmem:[%s62 + $0x78] sm:$0xf]
  %v94 = vld [vmem:[%s62 + $0x7c] sm:$0xf]
  %v95 = vld [vmem:[%s3] sm:$0xff]
  %v96 = vld [vmem:[%s3 + $0x8] sm:$0xff]
  %v97 = vld [vmem:[%s3 + $0x10] sm:$0xff]
  %v98 = vld [vmem:[%s3 + $0x18] sm:$0xff]
  %v99 = vld [vmem:[%s3 + $0x20] sm:$0xff]
  %v100 = vld [vmem:[%s3 + $0x28] sm:$0xff]
  %v101 = vld [vmem:[%s3 + $0x30] sm:$0xff]
  %v102 = vld [vmem:[%s3 + $0x38] sm:$0xff]
  %v103 = vld [vmem:[%s3 + $0x40] sm:$0xff]
  %v104 = vld [vmem:[%s3 + $0x48] sm:$0xff]
  %v105 = vld [vmem:[%s3 + $0x50] sm:$0xff]
  %v106 = vld [vmem:[%s3 + $0x58] sm:$0xff]
  %v107 = vld [vmem:[%s3 + $0x60] sm:$0xff]
  %v108 = vld [vmem:[%s3 + $0x68] sm:$0xff]
  %v109 = vld [vmem:[%s3 + $0x70] sm:$0xff]
  %v110 = vld [vmem:[%s3 + $0x78] sm:$0xff]
  %v111 = vld [vmem:[%s3 + $0x80] sm:$0xff]
  %v112 = vld [vmem:[%s3 + $0x88] sm:$0xff]
  %v113 = vld [vmem:[%s3 + $0x90] sm:$0xff]
  %v114 = vld [vmem:[%s3 + $0x98] sm:$0xff]
  %v115 = vld [vmem:[%s3 + $0xa0] sm:$0xff]
  %v116 = vld [vmem:[%s3 + $0xa8] sm:$0xff]
  %v117 = vld [vmem:[%s3 + $0xb0] sm:$0xff]
  %v118 = vld [vmem:[%s3 + $0xb8] sm:$0xff]
  %v119 = vld [vmem:[%s3 + $0xc0] sm:$0xff]
  %v120 = vld [vmem:[%s3 + $0xc8] sm:$0xff]
  %v121 = vld [vmem:[%s3 + $0xd0] sm:$0xff]
  %v122 = vld [vmem:[%s3 + $0xd8] sm:$0xff]
  %v123 = vld [vmem:[%s3 + $0xe0] sm:$0xff]
  %v124 = vld [vmem:[%s3 + $0xe8] sm:$0xff]
  %v125 = vld [vmem:[%s3 + $0xf0] sm:$0xff]
  %v126 = vld [vmem:[%s3 + $0xf8] sm:$0xff]
  %v127 = vld [vmem:[%s0] sm:$0xff]
  %v128 = vld [vmem:[%s0 + $0x8] sm:$0xff]
  %v129 = vld [vmem:[%s0 + $0x10] sm:$0xff]
  %v130 = vld [vmem:[%s0 + $0x18] sm:$0xff]
  %v131 = vld [vmem:[%s0 + $0x20] sm:$0xff]
  %v132 = vld [vmem:[%s0 + $0x28] sm:$0xff]
  %v133 = vld [vmem:[%s0 + $0x30] sm:$0xff]
  %v134 = vld [vmem:[%s0 + $0x38] sm:$0xff]
  %v135 = vld [vmem:[%s0 + $0x40] sm:$0xff]
  %v136 = vld [vmem:[%s0 + $0x48] sm:$0xff]
  %v137 = vld [vmem:[%s0 + $0x50] sm:$0xff]
  %v138 = vld [vmem:[%s0 + $0x58] sm:$0xff]
  %v139 = vld [vmem:[%s0 + $0x60] sm:$0xff]
  %v140 = vld [vmem:[%s0 + $0x68] sm:$0xff]
  %v141 = vld [vmem:[%s0 + $0x70] sm:$0xff]
  %v142 = vld [vmem:[%s0 + $0x78] sm:$0xff]
  %v143 = vld [vmem:[%s0 + $0x80] sm:$0xff]
  %v144 = vld [vmem:[%s0 + $0x88] sm:$0xff]
  %v145 = vld [vmem:[%s0 + $0x90] sm:$0xff]
  %v146 = vld [vmem:[%s0 + $0x98] sm:$0xff]
  %v147 = vld [vmem:[%s0 + $0xa0] sm:$0xff]
  %v148 = vld [vmem:[%s0 + $0xa8] sm:$0xff]
  %v149 = vld [vmem:[%s0 + $0xb0] sm:$0xff]
  %v150 = vld [vmem:[%s0 + $0xb8] sm:$0xff]
  %v151 = vld [vmem:[%s0 + $0xc0] sm:$0xff]
  %v152 = vld [vmem:[%s0 + $0xc8] sm:$0xff]
  %v153 = vld [vmem:[%s0 + $0xd0] sm:$0xff]
  %v154 = vld [vmem:[%s0 + $0xd8] sm:$0xff]
  %v155 = vld [vmem:[%s0 + $0xe0] sm:$0xff]
  %v156 = vld [vmem:[%s0 + $0xe8] sm:$0xff]
  %v157 = vld [vmem:[%s0 + $0xf0] sm:$0xff]
  %v158 = vld [vmem:[%s0 + $0xf8] sm:$0xff]
  %v191 = vunpack.c.l.b16 %v127
  %v192 = vunpack.c.h.b16 %v127
  %v193 = vunpack.c.l.b16 %v128
  %v194 = vunpack.c.h.b16 %v128
  %v195 = vunpack.c.l.b16 %v129
  %v196 = vunpack.c.h.b16 %v129
  %v197 = vunpack.c.l.b16 %v130
  %v198 = vunpack.c.h.b16 %v130
  %v199 = vunpack.c.l.b16 %v131
  %v200 = vunpack.c.h.b16 %v131
  %v201 = vunpack.c.l.b16 %v132
  %v202 = vunpack.c.h.b16 %v132
  %v203 = vunpack.c.l.b16 %v133
  %v204 = vunpack.c.h.b16 %v133
  %v205 = vunpack.c.l.b16 %v134
  %v206 = vunpack.c.h.b16 %v134
  %v207 = vunpack.c.l.b16 %v135
  %v208 = vunpack.c.h.b16 %v135
  %v209 = vunpack.c.l.b16 %v136
  %v210 = vunpack.c.h.b16 %v136
  %v211 = vunpack.c.l.b16 %v137
  %v212 = vunpack.c.h.b16 %v137
  %v213 = vunpack.c.l.b16 %v138
  %v214 = vunpack.c.h.b16 %v138
  %v215 = vunpack.c.l.b16 %v139
  %v216 = vunpack.c.h.b16 %v139
  %v217 = vunpack.c.l.b16 %v140
  %v218 = vunpack.c.h.b16 %v140
  %v219 = vunpack.c.l.b16 %v141
  %v220 = vunpack.c.h.b16 %v141
  %v221 = vunpack.c.l.b16 %v142
  %v222 = vunpack.c.h.b16 %v142
  %v223 = vunpack.c.l.b16 %v143
  %v224 = vunpack.c.h.b16 %v143
  %v225 = vunpack.c.l.b16 %v144
  %v226 = vunpack.c.h.b16 %v144
  %v227 = vunpack.c.l.b16 %v145
  %v228 = vunpack.c.h.b16 %v145
  %v229 = vunpack.c.l.b16 %v146
  %v230 = vunpack.c.h.b16 %v146
  %v231 = vunpack.c.l.b16 %v147
  %v232 = vunpack.c.h.b16 %v147
  %v233 = vunpack.c.l.b16 %v148
  %v234 = vunpack.c.h.b16 %v148
  %v235 = vunpack.c.l.b16 %v149
  %v236 = vunpack.c.h.b16 %v149
  %v237 = vunpack.c.l.b16 %v150
  %v238 = vunpack.c.h.b16 %v150
  %v239 = vunpack.c.l.b16 %v151
  %v240 = vunpack.c.h.b16 %v151
  %v241 = vunpack.c.l.b16 %v152
  %v242 = vunpack.c.h.b16 %v152
  %v243 = vunpack.c.l.b16 %v153
  %v244 = vunpack.c.h.b16 %v153
  %v245 = vunpack.c.l.b16 %v154
  %v246 = vunpack.c.h.b16 %v154
  %v247 = vunpack.c.l.b16 %v155
  %v248 = vunpack.c.h.b16 %v155
  %v249 = vunpack.c.l.b16 %v156
  %v250 = vunpack.c.h.b16 %v156
  %v251 = vunpack.c.l.b16 %v157
  %v252 = vunpack.c.h.b16 %v157
  %v253 = vunpack.c.l.b16 %v158
  %v254 = vunpack.c.h.b16 %v158
  %v255 = vpack.c.b16 %v193, %v191
  %v256 = vpack.c.b16 %v194, %v192
  %v257 = vpack.c.b16 %v197, %v195
  %v258 = vpack.c.b16 %v198, %v196
  %v259 = vpack.c.b16 %v201, %v199
  %v260 = vpack.c.b16 %v202, %v200
  %v261 = vpack.c.b16 %v205, %v203
  %v262 = vpack.c.b16 %v206, %v204
  %v263 = vpack.c.b16 %v209, %v207
  %v264 = vpack.c.b16 %v210, %v208
  %v265 = vpack.c.b16 %v213, %v211
  %v266 = vpack.c.b16 %v214, %v212
  %v267 = vpack.c.b16 %v217, %v215
  %v268 = vpack.c.b16 %v218, %v216
  %v269 = vpack.c.b16 %v221, %v219
  %v270 = vpack.c.b16 %v222, %v220
  %v271 = vpack.c.b16 %v225, %v223
  %v272 = vpack.c.b16 %v226, %v224
  %v273 = vpack.c.b16 %v229, %v227
  %v274 = vpack.c.b16 %v230, %v228
  %v275 = vpack.c.b16 %v233, %v231
  %v276 = vpack.c.b16 %v234, %v232
  %v277 = vpack.c.b16 %v237, %v235
  %v278 = vpack.c.b16 %v238, %v236
  %v279 = vpack.c.b16 %v241, %v239
  %v280 = vpack.c.b16 %v242, %v240
  %v281 = vpack.c.b16 %v245, %v243
  %v282 = vpack.c.b16 %v246, %v244
  %v283 = vpack.c.b16 %v249, %v247
  %v284 = vpack.c.b16 %v250, %v248
  %v285 = vpack.c.b16 %v253, %v251
  %v286 = vpack.c.b16 %v254, %v252
  %v351 = vunpack.c.l.b16 %v63
  %v352 = vunpack.c.l.b16 %v64
  %v353 = vunpack.c.l.b16 %v65
  %v354 = vunpack.c.l.b16 %v66
  %v355 = vunpack.c.l.b16 %v67
  %v356 = vunpack.c.l.b16 %v68
  %v357 = vunpack.c.l.b16 %v69
  %v358 = vunpack.c.l.b16 %v70
  %v359 = vunpack.c.l.b16 %v71
  %v360 = vunpack.c.l.b16 %v72
  %v361 = vunpack.c.l.b16 %v73
  %v362 = vunpack.c.l.b16 %v74
  %v363 = vunpack.c.l.b16 %v75
  %v364 = vunpack.c.l.b16 %v76
  %v365 = vunpack.c.l.b16 %v77
  %v366 = vunpack.c.l.b16 %v78
  %v367 = vunpack.c.l.b16 %v79
  %v368 = vunpack.c.l.b16 %v80
  %v369 = vunpack.c.l.b16 %v81
  %v370 = vunpack.c.l.b16 %v82
  %v371 = vunpack.c.l.b16 %v83
  %v372 = vunpack.c.l.b16 %v84
  %v373 = vunpack.c.l.b16 %v85
  %v374 = vunpack.c.l.b16 %v86
  %v375 = vunpack.c.l.b16 %v87
  %v376 = vunpack.c.l.b16 %v88
  %v377 = vunpack.c.l.b16 %v89
  %v378 = vunpack.c.l.b16 %v90
  %v379 = vunpack.c.l.b16 %v91
  %v380 = vunpack.c.l.b16 %v92
  %v381 = vunpack.c.l.b16 %v93
  %v382 = vunpack.c.l.b16 %v94
  %v383 = vpack.c.b16 %v352, %v351
  %v384 = vpack.c.b16 %v354, %v353
  %v385 = vpack.c.b16 %v356, %v355
  %v386 = vpack.c.b16 %v358, %v357
  %v387 = vpack.c.b16 %v360, %v359
  %v388 = vpack.c.b16 %v362, %v361
  %v389 = vpack.c.b16 %v364, %v363
  %v390 = vpack.c.b16 %v366, %v365
  %v391 = vpack.c.b16 %v368, %v367
  %v392 = vpack.c.b16 %v370, %v369
  %v393 = vpack.c.b16 %v372, %v371
  %v394 = vpack.c.b16 %v374, %v373
  %v395 = vpack.c.b16 %v376, %v375
  %v396 = vpack.c.b16 %v378, %v377
  %v397 = vpack.c.b16 %v380, %v379
  %v398 = vpack.c.b16 %v382, %v381
  %415 = vmatprep.subr.bf16.mxu0 0
  %416 = vmatpush1.bf16.msra.mxu0 %v390
  %417 = vmatprep.subr.bf16.mxu0 0
  %418 = vmatpush1.bf16.msra.mxu0 %v389
  %419 = vmatprep.subr.bf16.mxu0 0
  %420 = vmatpush1.bf16.msra.mxu0 %v388
  %421 = vmatprep.subr.bf16.mxu0 0
  %422 = vmatpush1.bf16.msra.mxu0 %v387
  %423 = vmatprep.subr.bf16.mxu0 0
  %424 = vmatpush1.bf16.msra.mxu0 %v386
  %425 = vmatprep.subr.bf16.mxu0 0
  %426 = vmatpush1.bf16.msra.mxu0 %v385
  %427 = vmatprep.subr.bf16.mxu0 0
  %428 = vmatpush1.bf16.msra.mxu0 %v384
  %429 = vmatprep.subr.bf16.mxu0 0
  %430 = vmatpush1.bf16.msra.mxu0 %v383
  %431 = vmatprep.subr.bf16.mxu0 0
  %432 = vmatpush2.bf16.msra.mxu0 %v398
  %433 = vmatprep.subr.bf16.mxu0 0
  %434 = vmatpush2.bf16.msra.mxu0 %v397
  %435 = vmatprep.subr.bf16.mxu0 0
  %436 = vmatpush2.bf16.msra.mxu0 %v396
  %437 = vmatprep.subr.bf16.mxu0 0
  %438 = vmatpush2.bf16.msra.mxu0 %v395
  %439 = vmatprep.subr.bf16.mxu0 0
  %440 = vmatpush2.bf16.msra.mxu0 %v394
  %441 = vmatprep.subr.bf16.mxu0 0
  %442 = vmatpush2.bf16.msra.mxu0 %v393
  %443 = vmatprep.subr.bf16.mxu0 0
  %444 = vmatpush2.bf16.msra.mxu0 %v392
  %445 = vmatprep.subr.bf16.mxu0 0
  %446 = vmatpush2.bf16.msra.mxu0 %v391
  %447 = vmatprep.mubr.bf16.mxu0 %v256
  %448 = vmatmul.mubr.bf16.gmra.mxu0 %v255
  %v449 = vpop.f32.mrf.mxu0
  %v450 = vadd.f32 0.0, %v449
  %v451 = vpop.f32.mrf.mxu0
  %v452 = vpop.f32.mrf.mxu0
  %v453 = vadd.f32 0.0, %v452
  %v454 = vpop.f32.mrf.mxu0
  %455 = vmatprep.mubr.bf16.mxu0 %v258
  %456 = vmatmul.mubr.bf16.gmra.mxu0 %v257
  %v457 = vpop.f32.mrf.mxu0
  %v458 = vadd.f32 0.0, %v457
  %v459 = vpop.f32.mrf.mxu0
  %v460 = vpop.f32.mrf.mxu0
  %v461 = vadd.f32 0.0, %v460
  %v462 = vpop.f32.mrf.mxu0
  %463 = vmatprep.mubr.bf16.mxu0 %v260
  %464 = vmatmul.mubr.bf16.gmra.mxu0 %v259
  %v465 = vpop.f32.mrf.mxu0
  %v466 = vadd.f32 0.0, %v465
  %v467 = vpop.f32.mrf.mxu0
  %v468 = vpop.f32.mrf.mxu0
  %v469 = vadd.f32 0.0, %v468
  %v470 = vpop.f32.mrf.mxu0
  %471 = vmatprep.mubr.bf16.mxu0 %v262
  %472 = vmatmul.mubr.bf16.gmra.mxu0 %v261
  %v473 = vpop.f32.mrf.mxu0
  %v474 = vadd.f32 0.0, %v473
  %v475 = vpop.f32.mrf.mxu0
  %v476 = vpop.f32.mrf.mxu0
  %v477 = vadd.f32 0.0, %v476
  %v478 = vpop.f32.mrf.mxu0
  %479 = vmatprep.mubr.bf16.mxu0 %v264
  %480 = vmatmul.mubr.bf16.gmra.mxu0 %v263
  %v481 = vpop.f32.mrf.mxu0
  %v482 = vadd.f32 0.0, %v481
  %v483 = vpop.f32.mrf.mxu0
  %v484 = vpop.f32.mrf.mxu0
  %v485 = vadd.f32 0.0, %v484
  %v486 = vpop.f32.mrf.mxu0
  %487 = vmatprep.mubr.bf16.mxu0 %v266
  %488 = vmatmul.mubr.bf16.gmra.mxu0 %v265
  %v489 = vpop.f32.mrf.mxu0
  %v490 = vadd.f32 0.0, %v489
  %v491 = vpop.f32.mrf.mxu0
  %v492 = vpop.f32.mrf.mxu0
  %v493 = vadd.f32 0.0, %v492
  %v494 = vpop.f32.mrf.mxu0
  %495 = vmatprep.mubr.bf16.mxu0 %v268
  %496 = vmatmul.mubr.bf16.gmra.mxu0 %v267
  %v497 = vpop.f32.mrf.mxu0
  %v498 = vadd.f32 0.0, %v497
  %v499 = vpop.f32.mrf.mxu0
  %v500 = vpop.f32.mrf.mxu0
  %v501 = vadd.f32 0.0, %v500
  %v502 = vpop.f32.mrf.mxu0
  %503 = vmatprep.mubr.bf16.mxu0 %v270
  %504 = vmatmul.mubr.bf16.gmra.mxu0 %v269
  %v505 = vpop.f32.mrf.mxu0
  %v506 = vadd.f32 0.0, %v505
  %v507 = vpop.f32.mrf.mxu0
  %v508 = vpop.f32.mrf.mxu0
  %v509 = vadd.f32 0.0, %v508
  %v510 = vpop.f32.mrf.mxu0
  %511 = vmatprep.mubr.bf16.mxu0 %v272
  %512 = vmatmul.mubr.bf16.gmra.mxu0 %v271
  %v513 = vpop.f32.mrf.mxu0
  %v514 = vadd.f32 0.0, %v513
  %v515 = vpop.f32.mrf.mxu0
  %v516 = vpop.f32.mrf.mxu0
  %v517 = vadd.f32 0.0, %v516
  %v518 = vpop.f32.mrf.mxu0
  %519 = vmatprep.mubr.bf16.mxu0 %v274
  %520 = vmatmul.mubr.bf16.gmra.mxu0 %v273
  %v521 = vpop.f32.mrf.mxu0
  %v522 = vadd.f32 0.0, %v521
  %v523 = vpop.f32.mrf.mxu0
  %v524 = vpop.f32.mrf.mxu0
  %v525 = vadd.f32 0.0, %v524
  %v526 = vpop.f32.mrf.mxu0
  %527 = vmatprep.mubr.bf16.mxu0 %v276
  %528 = vmatmul.mubr.bf16.gmra.mxu0 %v275
  %v529 = vpop.f32.mrf.mxu0
  %v530 = vadd.f32 0.0, %v529
  %v531 = vpop.f32.mrf.mxu0
  %v532 = vpop.f32.mrf.mxu0
  %v533 = vadd.f32 0.0, %v532
  %v534 = vpop.f32.mrf.mxu0
  %535 = vmatprep.mubr.bf16.mxu0 %v278
  %536 = vmatmul.mubr.bf16.gmra.mxu0 %v277
  %v537 = vpop.f32.mrf.mxu0
  %v538 = vadd.f32 0.0, %v537
  %v539 = vpop.f32.mrf.mxu0
  %v540 = vpop.f32.mrf.mxu0
  %v541 = vadd.f32 0.0, %v540
  %v542 = vpop.f32.mrf.mxu0
  %543 = vmatprep.mubr.bf16.mxu0 %v280
  %544 = vmatmul.mubr.bf16.gmra.mxu0 %v279
  %v545 = vpop.f32.mrf.mxu0
  %v546 = vadd.f32 0.0, %v545
  %v547 = vpop.f32.mrf.mxu0
  %v548 = vpop.f32.mrf.mxu0
  %v549 = vadd.f32 0.0, %v548
  %v550 = vpop.f32.mrf.mxu0
  %551 = vmatprep.mubr.bf16.mxu0 %v282
  %552 = vmatmul.mubr.bf16.gmra.mxu0 %v281
  %v553 = vpop.f32.mrf.mxu0
  %v554 = vadd.f32 0.0, %v553
  %v555 = vpop.f32.mrf.mxu0
  %v556 = vpop.f32.mrf.mxu0
  %v557 = vadd.f32 0.0, %v556
  %v558 = vpop.f32.mrf.mxu0
  %559 = vmatprep.mubr.bf16.mxu0 %v284
  %560 = vmatmul.mubr.bf16.gmra.mxu0 %v283
  %v561 = vpop.f32.mrf.mxu0
  %v562 = vadd.f32 0.0, %v561
  %v563 = vpop.f32.mrf.mxu0
  %v564 = vpop.f32.mrf.mxu0
  %v565 = vadd.f32 0.0, %v564
  %v566 = vpop.f32.mrf.mxu0
  %567 = vmatprep.mubr.bf16.mxu0 %v286
  %568 = vmatmul.mubr.bf16.gmra.mxu0 %v285
  %v569 = vpop.f32.mrf.mxu0
  %v570 = vadd.f32 0.0, %v569
  %v571 = vpop.f32.mrf.mxu0
  %v572 = vpop.f32.mrf.mxu0
  %v573 = vadd.f32 0.0, %v572
  %v574 = vpop.f32.mrf.mxu0
  %575 = vdwg.mxu0
  %v576 = vadd.f32 %v95, %v450
  %v577 = vadd.f32 %v96, %v453
  %v578 = vadd.f32 %v97, %v458
  %v579 = vadd.f32 %v98, %v461
  %v580 = vadd.f32 %v99, %v466
  %v581 = vadd.f32 %v100, %v469
  %v582 = vadd.f32 %v101, %v474
  %v583 = vadd.f32 %v102, %v477
  %v584 = vadd.f32 %v103, %v482
  %v585 = vadd.f32 %v104, %v485
  %v586 = vadd.f32 %v105, %v490
  %v587 = vadd.f32 %v106, %v493
  %v588 = vadd.f32 %v107, %v498
  %v589 = vadd.f32 %v108, %v501
  %v590 = vadd.f32 %v109, %v506
  %v591 = vadd.f32 %v110, %v509
  %v592 = vadd.f32 %v111, %v514
  %v593 = vadd.f32 %v112, %v517
  %v594 = vadd.f32 %v113, %v522
  %v595 = vadd.f32 %v114, %v525
  %v596 = vadd.f32 %v115, %v530
  %v597 = vadd.f32 %v116, %v533
  %v598 = vadd.f32 %v117, %v538
  %v599 = vadd.f32 %v118, %v541
  %v600 = vadd.f32 %v119, %v546
  %v601 = vadd.f32 %v120, %v549
  %v602 = vadd.f32 %v121, %v554
  %v603 = vadd.f32 %v122, %v557
  %v604 = vadd.f32 %v123, %v562
  %v605 = vadd.f32 %v124, %v565
  %v606 = vadd.f32 %v125, %v570
  %v607 = vadd.f32 %v126, %v573
  %608 = vst [vmem:[%s3] sm:$0xff] %v576
  %609 = vst [vmem:[%s3 + $0x8] sm:$0xff] %v577
  %610 = vst [vmem:[%s3 + $0x10] sm:$0xff] %v578
  %611 = vst [vmem:[%s3 + $0x18] sm:$0xff] %v579
  %612 = vst [vmem:[%s3 + $0x20] sm:$0xff] %v580
  %613 = vst [vmem:[%s3 + $0x28] sm:$0xff] %v581
  %614 = vst [vmem:[%s3 + $0x30] sm:$0xff] %v582
  %615 = vst [vmem:[%s3 + $0x38] sm:$0xff] %v583
  %616 = vst [vmem:[%s3 + $0x40] sm:$0xff] %v584
  %617 = vst [vmem:[%s3 + $0x48] sm:$0xff] %v585
  %618 = vst [vmem:[%s3 + $0x50] sm:$0xff] %v586
  %619 = vst [vmem:[%s3 + $0x58] sm:$0xff] %v587
  %620 = vst [vmem:[%s3 + $0x60] sm:$0xff] %v588
  %621 = vst [vmem:[%s3 + $0x68] sm:$0xff] %v589
  %622 = vst [vmem:[%s3 + $0x70] sm:$0xff] %v590
  %623 = vst [vmem:[%s3 + $0x78] sm:$0xff] %v591
  %624 = vst [vmem:[%s3 + $0x80] sm:$0xff] %v592
  %625 = vst [vmem:[%s3 + $0x88] sm:$0xff] %v593
  %626 = vst [vmem:[%s3 + $0x90] sm:$0xff] %v594
  %627 = vst [vmem:[%s3 + $0x98] sm:$0xff] %v595
  %628 = vst [vmem:[%s3 + $0xa0] sm:$0xff] %v596
  %629 = vst [vmem:[%s3 + $0xa8] sm:$0xff] %v597
  %630 = vst [vmem:[%s3 + $0xb0] sm:$0xff] %v598
  %631 = vst [vmem:[%s3 + $0xb8] sm:$0xff] %v599
  %632 = vst [vmem:[%s3 + $0xc0] sm:$0xff] %v600
  %633 = vst [vmem:[%s3 + $0xc8] sm:$0xff] %v601
  %634 = vst [vmem:[%s3 + $0xd0] sm:$0xff] %v602
  %635 = vst [vmem:[%s3 + $0xd8] sm:$0xff] %v603
  %636 = vst [vmem:[%s3 + $0xe0] sm:$0xff] %v604
  %637 = vst [vmem:[%s3 + $0xe8] sm:$0xff] %v605
  %638 = vst [vmem:[%s3 + $0xf0] sm:$0xff] %v606
  %639 = vst [vmem:[%s3 + $0xf8] sm:$0xff] %v607
  // Predicated region
  $region18: #{gcn_forward.3} parent=0 // pred_check
    _
  $region19: #{gcn_forward.3} parent=0 // pred_check_branch
    %641 = sbr.rel (0) target = $region21
  $region20: #{gcn_forward.3} parent=0 // pred_region
    _
  $region21: #{gcn_forward.3} parent=0 // pred_fallthru
    _
  // Predicated region
  $region22: #{gcn_forward.3} parent=0 // pred_check
    _
  $region23: #{gcn_forward.3} parent=0 // pred_check_branch
    %643 = sbr.rel (0) target = $region25
  $region24: #{gcn_forward.3} parent=0 // pred_region
    _
  $region25: #{gcn_forward.3} parent=0 // pred_fallthru
    _

// kernel: gcn_forward.2
$region0: #{gcn_forward.2}
  #allocation0 [shape = 'u32[]', space=smem, size = 0x4, offset = 0x4, fixed_abs, tag = 'smem constant byte address 0x4 - core index']
  #allocation1 [shape = 'u32[144,128]{1,0:T(1,128)}', space=vmem, size = 0x12000, scoped, tag = 'internal scratch']
  %s0 = inlined_call_operand.vmem [shape: bf16[256,256], index: 0, kind: input, shape index: {}]
  %s1 = inlined_call_operand.vmem [shape: bf16[256,128], index: 1, kind: input, shape index: {}]
  %s2 = inlined_call_operand.vmem [shape: f32[1,128], index: 2, kind: input, shape index: {}]
  %s3 = inlined_call_operand.vmem [shape: f32[256,128], index: 3, kind: output, shape index: {}]
  %s4 = sld [smem:[#allocation0]]
  $region30: #{gcn_forward.2} parent=0
    _
  %s6 = ssub.s32 1, %s4
  %s7 = scalar_select 0, %s6, %s4
  // Predicated region
  $region2: #{gcn_forward.2} parent=0 // pred_check
    _
  $region3: #{gcn_forward.2} parent=0 // pred_check_branch
    %9 = sbr.rel (0) target = $region5
  $region4: #{gcn_forward.2} parent=0 // pred_region
    _
  $region5: #{gcn_forward.2} parent=0 // pred_fallthru
    _
  // Predicated region
  $region6: #{gcn_forward.2} parent=0 // pred_check
    _
  $region7: #{gcn_forward.2} parent=0 // pred_check_branch
    %11 = sbr.rel (0) target = $region9
  $region8: #{gcn_forward.2} parent=0 // pred_region
    _
  $region9: #{gcn_forward.2} parent=0 // pred_fallthru
    _
  // Predicated region
  $region10: #{gcn_forward.2} parent=0 // pred_check
    _
  $region11: #{gcn_forward.2} parent=0 // pred_check_branch
    %13 = sbr.rel (0) target = $region13
  $region12: #{gcn_forward.2} parent=0 // pred_region
    _
  $region13: #{gcn_forward.2} parent=0 // pred_fallthru
    _
  %p15 = scmp.eq.s32.totalorder 0, 0
  // Predicated region
  $region14: #{gcn_forward.2} parent=0 // pred_check
    %p16 = pneg %p15
  $region15: #{gcn_forward.2} parent=0 // pred_check_branch
    %18 = sbr.rel (%p16) target = $region17
  $region16: #{gcn_forward.2} parent=0 // pred_region
    %v19 = vld [vmem:[%s2] sm:$0x1]
    %v21 = vlaneseq
    %v22 = vshrl.u32 %v21, 7
    %v23 = vsub.s32 0, %v22
    %v24 = vrot.slane %v19, %v23
    %26 = vst [vmem:[%s3] sm:$0xff] %v24
    %27 = vst [vmem:[%s3 + $0x8] sm:$0xff] %v24
    %28 = vst [vmem:[%s3 + $0x10] sm:$0xff] %v24
    %29 = vst [vmem:[%s3 + $0x18] sm:$0xff] %v24
    %30 = vst [vmem:[%s3 + $0x20] sm:$0xff] %v24
    %31 = vst [vmem:[%s3 + $0x28] sm:$0xff] %v24
    %32 = vst [vmem:[%s3 + $0x30] sm:$0xff] %v24
    %33 = vst [vmem:[%s3 + $0x38] sm:$0xff] %v24
    %34 = vst [vmem:[%s3 + $0x40] sm:$0xff] %v24
    %35 = vst [vmem:[%s3 + $0x48] sm:$0xff] %v24
    %36 = vst [vmem:[%s3 + $0x50] sm:$0xff] %v24
    %37 = vst [vmem:[%s3 + $0x58] sm:$0xff] %v24
    %38 = vst [vmem:[%s3 + $0x60] sm:$0xff] %v24
    %39 = vst [vmem:[%s3 + $0x68] sm:$0xff] %v24
    %40 = vst [vmem:[%s3 + $0x70] sm:$0xff] %v24
    %41 = vst [vmem:[%s3 + $0x78] sm:$0xff] %v24
    %42 = vst [vmem:[%s3 + $0x80] sm:$0xff] %v24
    %43 = vst [vmem:[%s3 + $0x88] sm:$0xff] %v24
    %44 = vst [vmem:[%s3 + $0x90] sm:$0xff] %v24
    %45 = vst [vmem:[%s3 + $0x98] sm:$0xff] %v24
    %46 = vst [vmem:[%s3 + $0xa0] sm:$0xff] %v24
    %47 = vst [vmem:[%s3 + $0xa8] sm:$0xff] %v24
    %48 = vst [vmem:[%s3 + $0xb0] sm:$0xff] %v24
    %49 = vst [vmem:[%s3 + $0xb8] sm:$0xff] %v24
    %50 = vst [vmem:[%s3 + $0xc0] sm:$0xff] %v24
    %51 = vst [vmem:[%s3 + $0xc8] sm:$0xff] %v24
    %52 = vst [vmem:[%s3 + $0xd0] sm:$0xff] %v24
    %53 = vst [vmem:[%s3 + $0xd8] sm:$0xff] %v24
    %54 = vst [vmem:[%s3 + $0xe0] sm:$0xff] %v24
    %55 = vst [vmem:[%s3 + $0xe8] sm:$0xff] %v24
    %56 = vst [vmem:[%s3 + $0xf0] sm:$0xff] %v24
    %57 = vst [vmem:[%s3 + $0xf8] sm:$0xff] %v24
  $region17: #{gcn_forward.2} parent=0 // pred_fallthru
    _
  %s58 = smul.u32 0, 256
  %s59 = sshra.s32 %s58, 3
  %s60 = sand.u32 %s58, 7
  %s61 = smul.addr %s59, 4
  %s62 = scalar_lea.vmem %s1, %s61
  %v63 = vld [vmem:[%s62] sm:$0xf]
  %v64 = vld [vmem:[%s62 + $0x4] sm:$0xf]
  %v65 = vld [vmem:[%s62 + $0x8] sm:$0xf]
  %v66 = vld [vmem:[%s62 + $0xc] sm:$0xf]
  %v67 = vld [vmem:[%s62 + $0x10] sm:$0xf]
  %v68 = vld [vmem:[%s62 + $0x14] sm:$0xf]
  %v69 = vld [vmem:[%s62 + $0x18] sm:$0xf]
  %v70 = vld [vmem:[%s62 + $0x1c] sm:$0xf]
  %v71 = vld [vmem:[%s62 + $0x20] sm:$0xf]
  %v72 = vld [vmem:[%s62 + $0x24] sm:$0xf]
  %v73 = vld [vmem:[%s62 + $0x28] sm:$0xf]
  %v74 = vld [vmem:[%s62 + $0x2c] sm:$0xf]
  %v75 = vld [vmem:[%s62 + $0x30] sm:$0xf]
  %v76 = vld [vmem:[%s62 + $0x34] sm:$0xf]
  %v77 = vld [vmem:[%s62 + $0x38] sm:$0xf]
  %v78 = vld [vmem:[%s62 + $0x3c] sm:$0xf]
  %v79 = vld [vmem:[%s62 + $0x40] sm:$0xf]
  %v80 = vld [vmem:[%s62 + $0x44] sm:$0xf]
  %v81 = vld [vmem:[%s62 + $0x48] sm:$0xf]
  %v82 = vld [vmem:[%s62 + $0x4c] sm:$0xf]
  %v83 = vld [vmem:[%s62 + $0x50] sm:$0xf]
  %v84 = vld [vmem:[%s62 + $0x54] sm:$0xf]
  %v85 = vld [vmem:[%s62 + $0x58] sm:$0xf]
  %v86 = vld [vmem:[%s62 + $0x5c] sm:$0xf]
  %v87 = vld [vmem:[%s62 + $0x60] sm:$0xf]
  %v88 = vld [vmem:[%s62 + $0x64] sm:$0xf]
  %v89 = vld [vmem:[%s62 + $0x68] sm:$0xf]
  %v90 = vld [vmem:[%s62 + $0x6c] sm:$0xf]
  %v91 = vld [vmem:[%s62 + $0x70] sm:$0xf]
  %v92 = vld [vmem:[%s62 + $0x74] sm:$0xf]
  %v93 = vld [vmem:[%s62 + $0x78] sm:$0xf]
  %v94 = vld [vmem:[%s62 + $0x7c] sm:$0xf]
  %v95 = vld [vmem:[%s3] sm:$0xff]
  %v96 = vld [vmem:[%s3 + $0x8] sm:$0xff]
  %v97 = vld [vmem:[%s3 + $0x10] sm:$0xff]
  %v98 = vld [vmem:[%s3 + $0x18] sm:$0xff]
  %v99 = vld [vmem:[%s3 + $0x20] sm:$0xff]
  %v100 = vld [vmem:[%s3 + $0x28] sm:$0xff]
  %v101 = vld [vmem:[%s3 + $0x30] sm:$0xff]
  %v102 = vld [vmem:[%s3 + $0x38] sm:$0xff]
  %v103 = vld [vmem:[%s3 + $0x40] sm:$0xff]
  %v104 = vld [vmem:[%s3 + $0x48] sm:$0xff]
  %v105 = vld [vmem:[%s3 + $0x50] sm:$0xff]
  %v106 = vld [vmem:[%s3 + $0x58] sm:$0xff]
  %v107 = vld [vmem:[%s3 + $0x60] sm:$0xff]
  %v108 = vld [vmem:[%s3 + $0x68] sm:$0xff]
  %v109 = vld [vmem:[%s3 + $0x70] sm:$0xff]
  %v110 = vld [vmem:[%s3 + $0x78] sm:$0xff]
  %v111 = vld [vmem:[%s3 + $0x80] sm:$0xff]
  %v112 = vld [vmem:[%s3 + $0x88] sm:$0xff]
  %v113 = vld [vmem:[%s3 + $0x90] sm:$0xff]
  %v114 = vld [vmem:[%s3 + $0x98] sm:$0xff]
  %v115 = vld [vmem:[%s3 + $0xa0] sm:$0xff]
  %v116 = vld [vmem:[%s3 + $0xa8] sm:$0xff]
  %v117 = vld [vmem:[%s3 + $0xb0] sm:$0xff]
  %v118 = vld [vmem:[%s3 + $0xb8] sm:$0xff]
  %v119 = vld [vmem:[%s3 + $0xc0] sm:$0xff]
  %v120 = vld [vmem:[%s3 + $0xc8] sm:$0xff]
  %v121 = vld [vmem:[%s3 + $0xd0] sm:$0xff]
  %v122 = vld [vmem:[%s3 + $0xd8] sm:$0xff]
  %v123 = vld [vmem:[%s3 + $0xe0] sm:$0xff]
  %v124 = vld [vmem:[%s3 + $0xe8] sm:$0xff]
  %v125 = vld [vmem:[%s3 + $0xf0] sm:$0xff]
  %v126 = vld [vmem:[%s3 + $0xf8] sm:$0xff]
  %v127 = vld [vmem:[%s0] sm:$0xff]
  %v128 = vld [vmem:[%s0 + $0x8] sm:$0xff]
  %v129 = vld [vmem:[%s0 + $0x10] sm:$0xff]
  %v130 = vld [vmem:[%s0 + $0x18] sm:$0xff]
  %v131 = vld [vmem:[%s0 + $0x20] sm:$0xff]
  %v132 = vld [vmem:[%s0 + $0x28] sm:$0xff]
  %v133 = vld [vmem:[%s0 + $0x30] sm:$0xff]
  %v134 = vld [vmem:[%s0 + $0x38] sm:$0xff]
  %v135 = vld [vmem:[%s0 + $0x40] sm:$0xff]
  %v136 = vld [vmem:[%s0 + $0x48] sm:$0xff]
  %v137 = vld [vmem:[%s0 + $0x50] sm:$0xff]
  %v138 = vld [vmem:[%s0 + $0x58] sm:$0xff]
  %v139 = vld [vmem:[%s0 + $0x60] sm:$0xff]
  %v140 = vld [vmem:[%s0 + $0x68] sm:$0xff]
  %v141 = vld [vmem:[%s0 + $0x70] sm:$0xff]
  %v142 = vld [vmem:[%s0 + $0x78] sm:$0xff]
  %v143 = vld [vmem:[%s0 + $0x80] sm:$0xff]
  %v144 = vld [vmem:[%s0 + $0x88] sm:$0xff]
  %v145 = vld [vmem:[%s0 + $0x90] sm:$0xff]
  %v146 = vld [vmem:[%s0 + $0x98] sm:$0xff]
  %v147 = vld [vmem:[%s0 + $0xa0] sm:$0xff]
  %v148 = vld [vmem:[%s0 + $0xa8] sm:$0xff]
  %v149 = vld [vmem:[%s0 + $0xb0] sm:$0xff]
  %v150 = vld [vmem:[%s0 + $0xb8] sm:$0xff]
  %v151 = vld [vmem:[%s0 + $0xc0] sm:$0xff]
  %v152 = vld [vmem:[%s0 + $0xc8] sm:$0xff]
  %v153 = vld [vmem:[%s0 + $0xd0] sm:$0xff]
  %v154 = vld [vmem:[%s0 + $0xd8] sm:$0xff]
  %v155 = vld [vmem:[%s0 + $0xe0] sm:$0xff]
  %v156 = vld [vmem:[%s0 + $0xe8] sm:$0xff]
  %v157 = vld [vmem:[%s0 + $0xf0] sm:$0xff]
  %v158 = vld [vmem:[%s0 + $0xf8] sm:$0xff]
  %v191 = vunpack.c.l.b16 %v127
  %v192 = vunpack.c.h.b16 %v127
  %v193 = vunpack.c.l.b16 %v128
  %v194 = vunpack.c.h.b16 %v128
  %v195 = vunpack.c.l.b16 %v129
  %v196 = vunpack.c.h.b16 %v129
  %v197 = vunpack.c.l.b16 %v130
  %v198 = vunpack.c.h.b16 %v130
  %v199 = vunpack.c.l.b16 %v131
  %v200 = vunpack.c.h.b16 %v131
  %v201 = vunpack.c.l.b16 %v132
  %v202 = vunpack.c.h.b16 %v132
  %v203 = vunpack.c.l.b16 %v133
  %v204 = vunpack.c.h.b16 %v133
  %v205 = vunpack.c.l.b16 %v134
  %v206 = vunpack.c.h.b16 %v134
  %v207 = vunpack.c.l.b16 %v135
  %v208 = vunpack.c.h.b16 %v135
  %v209 = vunpack.c.l.b16 %v136
  %v210 = vunpack.c.h.b16 %v136
  %v211 = vunpack.c.l.b16 %v137
  %v212 = vunpack.c.h.b16 %v137
  %v213 = vunpack.c.l.b16 %v138
  %v214 = vunpack.c.h.b16 %v138
  %v215 = vunpack.c.l.b16 %v139
  %v216 = vunpack.c.h.b16 %v139
  %v217 = vunpack.c.l.b16 %v140
  %v218 = vunpack.c.h.b16 %v140
  %v219 = vunpack.c.l.b16 %v141
  %v220 = vunpack.c.h.b16 %v141
  %v221 = vunpack.c.l.b16 %v142
  %v222 = vunpack.c.h.b16 %v142
  %v223 = vunpack.c.l.b16 %v143
  %v224 = vunpack.c.h.b16 %v143
  %v225 = vunpack.c.l.b16 %v144
  %v226 = vunpack.c.h.b16 %v144
  %v227 = vunpack.c.l.b16 %v145
  %v228 = vunpack.c.h.b16 %v145
  %v229 = vunpack.c.l.b16 %v146
  %v230 = vunpack.c.h.b16 %v146
  %v231 = vunpack.c.l.b16 %v147
  %v232 = vunpack.c.h.b16 %v147
  %v233 = vunpack.c.l.b16 %v148
  %v234 = vunpack.c.h.b16 %v148
  %v235 = vunpack.c.l.b16 %v149
  %v236 = vunpack.c.h.b16 %v149
  %v237 = vunpack.c.l.b16 %v150
  %v238 = vunpack.c.h.b16 %v150
  %v239 = vunpack.c.l.b16 %v151
  %v240 = vunpack.c.h.b16 %v151
  %v241 = vunpack.c.l.b16 %v152
  %v242 = vunpack.c.h.b16 %v152
  %v243 = vunpack.c.l.b16 %v153
  %v244 = vunpack.c.h.b16 %v153
  %v245 = vunpack.c.l.b16 %v154
  %v246 = vunpack.c.h.b16 %v154
  %v247 = vunpack.c.l.b16 %v155
  %v248 = vunpack.c.h.b16 %v155
  %v249 = vunpack.c.l.b16 %v156
  %v250 = vunpack.c.h.b16 %v156
  %v251 = vunpack.c.l.b16 %v157
  %v252 = vunpack.c.h.b16 %v157
  %v253 = vunpack.c.l.b16 %v158
  %v254 = vunpack.c.h.b16 %v158
  %v255 = vpack.c.b16 %v193, %v191
  %v256 = vpack.c.b16 %v194, %v192
  %v257 = vpack.c.b16 %v197, %v195
  %v258 = vpack.c.b16 %v198, %v196
  %v259 = vpack.c.b16 %v201, %v199
  %v260 = vpack.c.b16 %v202, %v200
  %v261 = vpack.c.b16 %v205, %v203
  %v262 = vpack.c.b16 %v206, %v204
  %v263 = vpack.c.b16 %v209, %v207
  %v264 = vpack.c.b16 %v210, %v208
  %v265 = vpack.c.b16 %v213, %v211
  %v266 = vpack.c.b16 %v214, %v212
  %v267 = vpack.c.b16 %v217, %v215
  %v268 = vpack.c.b16 %v218, %v216
  %v269 = vpack.c.b16 %v221, %v219
  %v270 = vpack.c.b16 %v222, %v220
  %v271 = vpack.c.b16 %v225, %v223
  %v272 = vpack.c.b16 %v226, %v224
  %v273 = vpack.c.b16 %v229, %v227
  %v274 = vpack.c.b16 %v230, %v228
  %v275 = vpack.c.b16 %v233, %v231
  %v276 = vpack.c.b16 %v234, %v232
  %v277 = vpack.c.b16 %v237, %v235
  %v278 = vpack.c.b16 %v238, %v236
  %v279 = vpack.c.b16 %v241, %v239
  %v280 = vpack.c.b16 %v242, %v240
  %v281 = vpack.c.b16 %v245, %v243
  %v282 = vpack.c.b16 %v246, %v244
  %v283 = vpack.c.b16 %v249, %v247
  %v284 = vpack.c.b16 %v250, %v248
  %v285 = vpack.c.b16 %v253, %v251
  %v286 = vpack.c.b16 %v254, %v252
  %v351 = vunpack.c.l.b16 %v63
  %v352 = vunpack.c.l.b16 %v64
  %v353 = vunpack.c.l.b16 %v65
  %v354 = vunpack.c.l.b16 %v66
  %v355 = vunpack.c.l.b16 %v67
  %v356 = vunpack.c.l.b16 %v68
  %v357 = vunpack.c.l.b16 %v69
  %v358 = vunpack.c.l.b16 %v70
  %v359 = vunpack.c.l.b16 %v71
  %v360 = vunpack.c.l.b16 %v72
  %v361 = vunpack.c.l.b16 %v73
  %v362 = vunpack.c.l.b16 %v74
  %v363 = vunpack.c.l.b16 %v75
  %v364 = vunpack.c.l.b16 %v76
  %v365 = vunpack.c.l.b16 %v77
  %v366 = vunpack.c.l.b16 %v78
  %v367 = vunpack.c.l.b16 %v79
  %v368 = vunpack.c.l.b16 %v80
  %v369 = vunpack.c.l.b16 %v81
  %v370 = vunpack.c.l.b16 %v82
  %v371 = vunpack.c.l.b16 %v83
  %v372 = vunpack.c.l.b16 %v84
  %v373 = vunpack.c.l.b16 %v85
  %v374 = vunpack.c.l.b16 %v86
  %v375 = vunpack.c.l.b16 %v87
  %v376 = vunpack.c.l.b16 %v88
  %v377 = vunpack.c.l.b16 %v89
  %v378 = vunpack.c.l.b16 %v90
  %v379 = vunpack.c.l.b16 %v91
  %v380 = vunpack.c.l.b16 %v92
  %v381 = vunpack.c.l.b16 %v93
  %v382 = vunpack.c.l.b16 %v94
  %v383 = vpack.c.b16 %v352, %v351
  %v384 = vpack.c.b16 %v354, %v353
  %v385 = vpack.c.b16 %v356, %v355
  %v386 = vpack.c.b16 %v358, %v357
  %v387 = vpack.c.b16 %v360, %v359
  %v388 = vpack.c.b16 %v362, %v361
  %v389 = vpack.c.b16 %v364, %v363
  %v390 = vpack.c.b16 %v366, %v365
  %v391 = vpack.c.b16 %v368, %v367
  %v392 = vpack.c.b16 %v370, %v369
  %v393 = vpack.c.b16 %v372, %v371
  %v394 = vpack.c.b16 %v374, %v373
  %v395 = vpack.c.b16 %v376, %v375
  %v396 = vpack.c.b16 %v378, %v377
  %v397 = vpack.c.b16 %v380, %v379
  %v398 = vpack.c.b16 %v382, %v381
  %415 = vmatprep.subr.bf16.mxu0 0
  %416 = vmatpush1.bf16.msra.mxu0 %v390
  %417 = vmatprep.subr.bf16.mxu0 0
  %418 = vmatpush1.bf16.msra.mxu0 %v389
  %419 = vmatprep.subr.bf16.mxu0 0
  %420 = vmatpush1.bf16.msra.mxu0 %v388
  %421 = vmatprep.subr.bf16.mxu0 0
  %422 = vmatpush1.bf16.msra.mxu0 %v387
  %423 = vmatprep.subr.bf16.mxu0 0
  %424 = vmatpush1.bf16.msra.mxu0 %v386
  %425 = vmatprep.subr.bf16.mxu0 0
  %426 = vmatpush1.bf16.msra.mxu0 %v385
  %427 = vmatprep.subr.bf16.mxu0 0
  %428 = vmatpush1.bf16.msra.mxu0 %v384
  %429 = vmatprep.subr.bf16.mxu0 0
  %430 = vmatpush1.bf16.msra.mxu0 %v383
  %431 = vmatprep.subr.bf16.mxu0 0
  %432 = vmatpush2.bf16.msra.mxu0 %v398
  %433 = vmatprep.subr.bf16.mxu0 0
  %434 = vmatpush2.bf16.msra.mxu0 %v397
  %435 = vmatprep.subr.bf16.mxu0 0
  %436 = vmatpush2.bf16.msra.mxu0 %v396
  %437 = vmatprep.subr.bf16.mxu0 0
  %438 = vmatpush2.bf16.msra.mxu0 %v395
  %439 = vmatprep.subr.bf16.mxu0 0
  %440 = vmatpush2.bf16.msra.mxu0 %v394
  %441 = vmatprep.subr.bf16.mxu0 0
  %442 = vmatpush2.bf16.msra.mxu0 %v393
  %443 = vmatprep.subr.bf16.mxu0 0
  %444 = vmatpush2.bf16.msra.mxu0 %v392
  %445 = vmatprep.subr.bf16.mxu0 0
  %446 = vmatpush2.bf16.msra.mxu0 %v391
  %447 = vmatprep.mubr.bf16.mxu0 %v256
  %448 = vmatmul.mubr.bf16.gmra.mxu0 %v255
  %v449 = vpop.f32.mrf.mxu0
  %v450 = vadd.f32 0.0, %v449
  %v451 = vpop.f32.mrf.mxu0
  %v452 = vpop.f32.mrf.mxu0
  %v453 = vadd.f32 0.0, %v452
  %v454 = vpop.f32.mrf.mxu0
  %455 = vmatprep.mubr.bf16.mxu0 %v258
  %456 = vmatmul.mubr.bf16.gmra.mxu0 %v257
  %v457 = vpop.f32.mrf.mxu0
  %v458 = vadd.f32 0.0, %v457
  %v459 = vpop.f32.mrf.mxu0
  %v460 = vpop.f32.mrf.mxu0
  %v461 = vadd.f32 0.0, %v460
  %v462 = vpop.f32.mrf.mxu0
  %463 = vmatprep.mubr.bf16.mxu0 %v260
  %464 = vmatmul.mubr.bf16.gmra.mxu0 %v259
  %v465 = vpop.f32.mrf.mxu0
  %v466 = vadd.f32 0.0, %v465
  %v467 = vpop.f32.mrf.mxu0
  %v468 = vpop.f32.mrf.mxu0
  %v469 = vadd.f32 0.0, %v468
  %v470 = vpop.f32.mrf.mxu0
  %471 = vmatprep.mubr.bf16.mxu0 %v262
  %472 = vmatmul.mubr.bf16.gmra.mxu0 %v261
  %v473 = vpop.f32.mrf.mxu0
  %v474 = vadd.f32 0.0, %v473
  %v475 = vpop.f32.mrf.mxu0
  %v476 = vpop.f32.mrf.mxu0
  %v477 = vadd.f32 0.0, %v476
  %v478 = vpop.f32.mrf.mxu0
  %479 = vmatprep.mubr.bf16.mxu0 %v264
  %480 = vmatmul.mubr.bf16.gmra.mxu0 %v263
  %v481 = vpop.f32.mrf.mxu0
  %v482 = vadd.f32 0.0, %v481
  %v483 = vpop.f32.mrf.mxu0
  %v484 = vpop.f32.mrf.mxu0
  %v485 = vadd.f32 0.0, %v484
  %v486 = vpop.f32.mrf.mxu0
  %487 = vmatprep.mubr.bf16.mxu0 %v266
  %488 = vmatmul.mubr.bf16.gmra.mxu0 %v265
  %v489 = vpop.f32.mrf.mxu0
  %v490 = vadd.f32 0.0, %v489
  %v491 = vpop.f32.mrf.mxu0
  %v492 = vpop.f32.mrf.mxu0
  %v493 = vadd.f32 0.0, %v492
  %v494 = vpop.f32.mrf.mxu0
  %495 = vmatprep.mubr.bf16.mxu0 %v268
  %496 = vmatmul.mubr.bf16.gmra.mxu0 %v267
  %v497 = vpop.f32.mrf.mxu0
  %v498 = vadd.f32 0.0, %v497
  %v499 = vpop.f32.mrf.mxu0
  %v500 = vpop.f32.mrf.mxu0
  %v501 = vadd.f32 0.0, %v500
  %v502 = vpop.f32.mrf.mxu0
  %503 = vmatprep.mubr.bf16.mxu0 %v270
  %504 = vmatmul.mubr.bf16.gmra.mxu0 %v269
  %v505 = vpop.f32.mrf.mxu0
  %v506 = vadd.f32 0.0, %v505
  %v507 = vpop.f32.mrf.mxu0
  %v508 = vpop.f32.mrf.mxu0
  %v509 = vadd.f32 0.0, %v508
  %v510 = vpop.f32.mrf.mxu0
  %511 = vmatprep.mubr.bf16.mxu0 %v272
  %512 = vmatmul.mubr.bf16.gmra.mxu0 %v271
  %v513 = vpop.f32.mrf.mxu0
  %v514 = vadd.f32 0.0, %v513
  %v515 = vpop.f32.mrf.mxu0
  %v516 = vpop.f32.mrf.mxu0
  %v517 = vadd.f32 0.0, %v516
  %v518 = vpop.f32.mrf.mxu0
  %519 = vmatprep.mubr.bf16.mxu0 %v274
  %520 = vmatmul.mubr.bf16.gmra.mxu0 %v273
  %v521 = vpop.f32.mrf.mxu0
  %v522 = vadd.f32 0.0, %v521
  %v523 = vpop.f32.mrf.mxu0
  %v524 = vpop.f32.mrf.mxu0
  %v525 = vadd.f32 0.0, %v524
  %v526 = vpop.f32.mrf.mxu0
  %527 = vmatprep.mubr.bf16.mxu0 %v276
  %528 = vmatmul.mubr.bf16.gmra.mxu0 %v275
  %v529 = vpop.f32.mrf.mxu0
  %v530 = vadd.f32 0.0, %v529
  %v531 = vpop.f32.mrf.mxu0
  %v532 = vpop.f32.mrf.mxu0
  %v533 = vadd.f32 0.0, %v532
  %v534 = vpop.f32.mrf.mxu0
  %535 = vmatprep.mubr.bf16.mxu0 %v278
  %536 = vmatmul.mubr.bf16.gmra.mxu0 %v277
  %v537 = vpop.f32.mrf.mxu0
  %v538 = vadd.f32 0.0, %v537
  %v539 = vpop.f32.mrf.mxu0
  %v540 = vpop.f32.mrf.mxu0
  %v541 = vadd.f32 0.0, %v540
  %v542 = vpop.f32.mrf.mxu0
  %543 = vmatprep.mubr.bf16.mxu0 %v280
  %544 = vmatmul.mubr.bf16.gmra.mxu0 %v279
  %v545 = vpop.f32.mrf.mxu0
  %v546 = vadd.f32 0.0, %v545
  %v547 = vpop.f32.mrf.mxu0
  %v548 = vpop.f32.mrf.mxu0
  %v549 = vadd.f32 0.0, %v548
  %v550 = vpop.f32.mrf.mxu0
  %551 = vmatprep.mubr.bf16.mxu0 %v282
  %552 = vmatmul.mubr.bf16.gmra.mxu0 %v281
  %v553 = vpop.f32.mrf.mxu0
  %v554 = vadd.f32 0.0, %v553
  %v555 = vpop.f32.mrf.mxu0
  %v556 = vpop.f32.mrf.mxu0
  %v557 = vadd.f32 0.0, %v556
  %v558 = vpop.f32.mrf.mxu0
  %559 = vmatprep.mubr.bf16.mxu0 %v284
  %560 = vmatmul.mubr.bf16.gmra.mxu0 %v283
  %v561 = vpop.f32.mrf.mxu0
  %v562 = vadd.f32 0.0, %v561
  %v563 = vpop.f32.mrf.mxu0
  %v564 = vpop.f32.mrf.mxu0
  %v565 = vadd.f32 0.0, %v564
  %v566 = vpop.f32.mrf.mxu0
  %567 = vmatprep.mubr.bf16.mxu0 %v286
  %568 = vmatmul.mubr.bf16.gmra.mxu0 %v285
  %v569 = vpop.f32.mrf.mxu0
  %v570 = vadd.f32 0.0, %v569
  %v571 = vpop.f32.mrf.mxu0
  %v572 = vpop.f32.mrf.mxu0
  %v573 = vadd.f32 0.0, %v572
  %v574 = vpop.f32.mrf.mxu0
  %575 = vdwg.mxu0
  %v576 = vadd.f32 %v95, %v450
  %v577 = vadd.f32 %v96, %v453
  %v578 = vadd.f32 %v97, %v458
  %v579 = vadd.f32 %v98, %v461
  %v580 = vadd.f32 %v99, %v466
  %v581 = vadd.f32 %v100, %v469
  %v582 = vadd.f32 %v101, %v474
  %v583 = vadd.f32 %v102, %v477
  %v584 = vadd.f32 %v103, %v482
  %v585 = vadd.f32 %v104, %v485
  %v586 = vadd.f32 %v105, %v490
  %v587 = vadd.f32 %v106, %v493
  %v588 = vadd.f32 %v107, %v498
  %v589 = vadd.f32 %v108, %v501
  %v590 = vadd.f32 %v109, %v506
  %v591 = vadd.f32 %v110, %v509
  %v592 = vadd.f32 %v111, %v514
  %v593 = vadd.f32 %v112, %v517
  %v594 = vadd.f32 %v113, %v522
  %v595 = vadd.f32 %v114, %v525
  %v596 = vadd.f32 %v115, %v530
  %v597 = vadd.f32 %v116, %v533
  %v598 = vadd.f32 %v117, %v538
  %v599 = vadd.f32 %v118, %v541
  %v600 = vadd.f32 %v119, %v546
  %v601 = vadd.f32 %v120, %v549
  %v602 = vadd.f32 %v121, %v554
  %v603 = vadd.f32 %v122, %v557
  %v604 = vadd.f32 %v123, %v562
  %v605 = vadd.f32 %v124, %v565
  %v606 = vadd.f32 %v125, %v570
  %v607 = vadd.f32 %v126, %v573
  %608 = vst [vmem:[%s3] sm:$0xff] %v576
  %609 = vst [vmem:[%s3 + $0x8] sm:$0xff] %v577
  %610 = vst [vmem:[%s3 + $0x10] sm:$0xff] %v578
  %611 = vst [vmem:[%s3 + $0x18] sm:$0xff] %v579
  %612 = vst [vmem:[%s3 + $0x20] sm:$0xff] %v580
  %613 = vst [vmem:[%s3 + $0x28] sm:$0xff] %v581
  %614 = vst [vmem:[%s3 + $0x30] sm:$0xff] %v582
  %615 = vst [vmem:[%s3 + $0x38] sm:$0xff] %v583
  %616 = vst [vmem:[%s3 + $0x40] sm:$0xff] %v584
  %617 = vst [vmem:[%s3 + $0x48] sm:$0xff] %v585
  %618 = vst [vmem:[%s3 + $0x50] sm:$0xff] %v586
  %619 = vst [vmem:[%s3 + $0x58] sm:$0xff] %v587
  %620 = vst [vmem:[%s3 + $0x60] sm:$0xff] %v588
  %621 = vst [vmem:[%s3 + $0x68] sm:$0xff] %v589
  %622 = vst [vmem:[%s3 + $0x70] sm:$0xff] %v590
  %623 = vst [vmem:[%s3 + $0x78] sm:$0xff] %v591
  %624 = vst [vmem:[%s3 + $0x80] sm:$0xff] %v592
  %625 = vst [vmem:[%s3 + $0x88] sm:$0xff] %v593
  %626 = vst [vmem:[%s3 + $0x90] sm:$0xff] %v594
  %627 = vst [vmem:[%s3 + $0x98] sm:$0xff] %v595
  %628 = vst [vmem:[%s3 + $0xa0] sm:$0xff] %v596
  %629 = vst [vmem:[%s3 + $0xa8] sm:$0xff] %v597
  %630 = vst [vmem:[%s3 + $0xb0] sm:$0xff] %v598
  %631 = vst [vmem:[%s3 + $0xb8] sm:$0xff] %v599
  %632 = vst [vmem:[%s3 + $0xc0] sm:$0xff] %v600
  %633 = vst [vmem:[%s3 + $0xc8] sm:$0xff] %v601
  %634 = vst [vmem:[%s3 + $0xd0] sm:$0xff] %v602
  %635 = vst [vmem:[%s3 + $0xd8] sm:$0xff] %v603
  %636 = vst [vmem:[%s3 + $0xe0] sm:$0xff] %v604
  %637 = vst [vmem:[%s3 + $0xe8] sm:$0xff] %v605
  %638 = vst [vmem:[%s3 + $0xf0] sm:$0xff] %v606
  %639 = vst [vmem:[%s3 + $0xf8] sm:$0xff] %v607
  // Predicated region
  $region18: #{gcn_forward.2} parent=0 // pred_check
    %p640 = pneg %p15
  $region19: #{gcn_forward.2} parent=0 // pred_check_branch
    %642 = sbr.rel (%p640) target = $region21
  $region20: #{gcn_forward.2} parent=0 // pred_region
    %v643 = vld [vmem:[%s3] sm:$0xff]
    %v644 = vld [vmem:[%s3 + $0x8] sm:$0xff]
    %v645 = vld [vmem:[%s3 + $0x10] sm:$0xff]
    %v646 = vld [vmem:[%s3 + $0x18] sm:$0xff]
    %v647 = vld [vmem:[%s3 + $0x20] sm:$0xff]
    %v648 = vld [vmem:[%s3 + $0x28] sm:$0xff]
    %v649 = vld [vmem:[%s3 + $0x30] sm:$0xff]
    %v650 = vld [vmem:[%s3 + $0x38] sm:$0xff]
    %v651 = vld [vmem:[%s3 + $0x40] sm:$0xff]
    %v652 = vld [vmem:[%s3 + $0x48] sm:$0xff]
    %v653 = vld [vmem:[%s3 + $0x50] sm:$0xff]
    %v654 = vld [vmem:[%s3 + $0x58] sm:$0xff]
    %v655 = vld [vmem:[%s3 + $0x60] sm:$0xff]
    %v656 = vld [vmem:[%s3 + $0x68] sm:$0xff]
    %v657 = vld [vmem:[%s3 + $0x70] sm:$0xff]
    %v658 = vld [vmem:[%s3 + $0x78] sm:$0xff]
    %v659 = vld [vmem:[%s3 + $0x80] sm:$0xff]
    %v660 = vld [vmem:[%s3 + $0x88] sm:$0xff]
    %v661 = vld [vmem:[%s3 + $0x90] sm:$0xff]
    %v662 = vld [vmem:[%s3 + $0x98] sm:$0xff]
    %v663 = vld [vmem:[%s3 + $0xa0] sm:$0xff]
    %v664 = vld [vmem:[%s3 + $0xa8] sm:$0xff]
    %v665 = vld [vmem:[%s3 + $0xb0] sm:$0xff]
    %v666 = vld [vmem:[%s3 + $0xb8] sm:$0xff]
    %v667 = vld [vmem:[%s3 + $0xc0] sm:$0xff]
    %v668 = vld [vmem:[%s3 + $0xc8] sm:$0xff]
    %v669 = vld [vmem:[%s3 + $0xd0] sm:$0xff]
    %v670 = vld [vmem:[%s3 + $0xd8] sm:$0xff]
    %v671 = vld [vmem:[%s3 + $0xe0] sm:$0xff]
    %v672 = vld [vmem:[%s3 + $0xe8] sm:$0xff]
    %v673 = vld [vmem:[%s3 + $0xf0] sm:$0xff]
    %v674 = vld [vmem:[%s3 + $0xf8] sm:$0xff]
    %v675 = vmax.f32 %v643, 0.0
    %v676 = vmax.f32 %v644, 0.0
    %v677 = vmax.f32 %v645, 0.0
    %v678 = vmax.f32 %v646, 0.0
    %v679 = vmax.f32 %v647, 0.0
    %v680 = vmax.f32 %v648, 0.0
    %v681 = vmax.f32 %v649, 0.0
    %v682 = vmax.f32 %v650, 0.0
    %v683 = vmax.f32 %v651, 0.0
    %v684 = vmax.f32 %v652, 0.0
    %v685 = vmax.f32 %v653, 0.0
    %v686 = vmax.f32 %v654, 0.0
    %v687 = vmax.f32 %v655, 0.0
    %v688 = vmax.f32 %v656, 0.0
    %v689 = vmax.f32 %v657, 0.0
    %v690 = vmax.f32 %v658, 0.0
    %v691 = vmax.f32 %v659, 0.0
    %v692 = vmax.f32 %v660, 0.0
    %v693 = vmax.f32 %v661, 0.0
    %v694 = vmax.f32 %v662, 0.0
    %v695 = vmax.f32 %v663, 0.0
    %v696 = vmax.f32 %v664, 0.0
    %v697 = vmax.f32 %v665, 0.0
    %v698 = vmax.f32 %v666, 0.0
    %v699 = vmax.f32 %v667, 0.0
    %v700 = vmax.f32 %v668, 0.0
    %v701 = vmax.f32 %v669, 0.0
    %v702 = vmax.f32 %v670, 0.0
    %v703 = vmax.f32 %v671, 0.0
    %v704 = vmax.f32 %v672, 0.0
    %v705 = vmax.f32 %v673, 0.0
    %v706 = vmax.f32 %v674, 0.0
    %707 = vst [vmem:[%s3] sm:$0xff] %v675
    %708 = vst [vmem:[%s3 + $0x8] sm:$0xff] %v676
    %709 = vst [vmem:[%s3 + $0x10] sm:$0xff] %v677
    %710 = vst [vmem:[%s3 + $0x18] sm:$0xff] %v678
    %711 = vst [vmem:[%s3 + $0x20] sm:$0xff] %v679
    %712 = vst [vmem:[%s3 + $0x28] sm:$0xff] %v680
    %713 = vst [vmem:[%s3 + $0x30] sm:$0xff] %v681
    %714 = vst [vmem:[%s3 + $0x38] sm:$0xff] %v682
    %715 = vst [vmem:[%s3 + $0x40] sm:$0xff] %v683
    %716 = vst [vmem:[%s3 + $0x48] sm:$0xff] %v684
    %717 = vst [vmem:[%s3 + $0x50] sm:$0xff] %v685
    %718 = vst [vmem:[%s3 + $0x58] sm:$0xff] %v686
    %719 = vst [vmem:[%s3 + $0x60] sm:$0xff] %v687
    %720 = vst [vmem:[%s3 + $0x68] sm:$0xff] %v688
    %721 = vst [vmem:[%s3 + $0x70] sm:$0xff] %v689
    %722 = vst [vmem:[%s3 + $0x78] sm:$0xff] %v690
    %723 = vst [vmem:[%s3 + $0x80] sm:$0xff] %v691
    %724 = vst [vmem:[%s3 + $0x88] sm:$0xff] %v692
    %725 = vst [vmem:[%s3 + $0x90] sm:$0xff] %v693
    %726 = vst [vmem:[%s3 + $0x98] sm:$0xff] %v694
    %727 = vst [vmem:[%s3 + $0xa0] sm:$0xff] %v695
    %728 = vst [vmem:[%s3 + $0xa8] sm:$0xff] %v696
    %729 = vst [vmem:[%s3 + $0xb0] sm:$0xff] %v697
    %730 = vst [vmem:[%s3 + $0xb8] sm:$0xff] %v698
    %731 = vst [vmem:[%s3 + $0xc0] sm:$0xff] %v699
    %732 = vst [vmem:[%s3 + $0xc8] sm:$0xff] %v700
    %733 = vst [vmem:[%s3 + $0xd0] sm:$0xff] %v701
    %734 = vst [vmem:[%s3 + $0xd8] sm:$0xff] %v702
    %735 = vst [vmem:[%s3 + $0xe0] sm:$0xff] %v703
    %736 = vst [vmem:[%s3 + $0xe8] sm:$0xff] %v704
    %737 = vst [vmem:[%s3 + $0xf0] sm:$0xff] %v705
    %738 = vst [vmem:[%s3 + $0xf8] sm:$0xff] %v706
  $region21: #{gcn_forward.2} parent=0 // pred_fallthru
    _
  // Predicated region
  $region22: #{gcn_forward.2} parent=0 // pred_check
    _
  $region23: #{gcn_forward.2} parent=0 // pred_check_branch
    %740 = sbr.rel (0) target = $region25
  $region24: #{gcn_forward.2} parent=0 // pred_region
    _
  $region25: #{gcn_forward.2} parent=0 // pred_fallthru
    _
  // Predicated region
  $region26: #{gcn_forward.2} parent=0 // pred_check
    _
  $region27: #{gcn_forward.2} parent=0 // pred_check_branch
    %742 = sbr.rel (0) target = $region29
  $region28: #{gcn_forward.2} parent=0 // pred_region
    _
  $region29: #{gcn_forward.2} parent=0 // pred_fallthru
    _

</llo_original>
